<compile_context>
chip_gen: v5e
topology: v5e:2x2
jax: 0.10.0
libtpu: 0.0.40
codegen_flags: <defaults>
</compile_context>

<pallas_src>
import math

import jax
import jax.numpy as jnp
from jax.experimental import pallas as pl
from jax.experimental.pallas import tpu as pltpu


def _critic_kernel(x_ref, w1_ref, w2_ref, w3_ref, w4_ref, b_ref, out_ref):
    """One batch tile, feature-major: activations are (features, batch_tile).

    Weights are in PyTorch's (out_features, in_features) layout, so each layer
    is h_new = W @ h + b[:, None].  The batch axis stays on the 128-lane axis
    throughout; the final store is lane-dense with no transpose.
    """
    cdt = w1_ref.dtype
    d1 = w1_ref.shape[0]
    d2 = w2_ref.shape[0]
    d3 = w3_ref.shape[0]
    do = w4_ref.shape[0]

    def cast(v):  # no-op in the (default) f32 path
        return v if v.dtype == cdt else v.astype(cdt)

    h = jnp.dot(w1_ref[...], cast(x_ref[...]), preferred_element_type=jnp.float32)
    h = jnp.maximum(h + b_ref[:d1, 0:1], 0.0)
    h = jnp.dot(w2_ref[...], cast(h), preferred_element_type=jnp.float32)
    h = jnp.maximum(h + b_ref[:d2, 1:2], 0.0)
    h = jnp.dot(w3_ref[...], cast(h), preferred_element_type=jnp.float32)
    h = jnp.maximum(h + b_ref[:d3, 2:3], 0.0)
    out = jnp.dot(w4_ref[...], cast(h), preferred_element_type=jnp.float32)
    out_ref[...] = (out + b_ref[:do, 3:4]).astype(out_ref.dtype)


def _padded_tile_bytes(shape, itemsize):
    """Bytes one VMEM buffer of this tile occupies after (8,128) padding."""
    shape = tuple(int(s) for s in shape)
    if len(shape) < 2:
        shape = (1,) * (2 - len(shape)) + shape
    lead = 1
    for s in shape[:-2]:
        lead *= s
    rows = ((shape[-2] + 7) // 8) * 8
    cols = ((shape[-1] + 127) // 128) * 128
    return lead * rows * cols * itemsize


def critical_network_forward(state, params, *, batch_tile=None,
                             weight_dtype=jnp.float32):
    """Forward pass of CriticalNetwork.

    state:  (B, input_size) float32 (PyTorch convention).
    params: (w1, b1, w2, b2, w3, b3, w4, b4) with weights in PyTorch's native
            (out_features, in_features) layout and 1-D biases.
    Returns (B, output_size) float32.
    """
    w1, b1, w2, b2, w3, b3, w4, b4 = params
    B_orig, in_size = state.shape
    assert w1.shape[1] == in_size
    dims = (w1.shape[0], w2.shape[0], w3.shape[0], w4.shape[0])
    out_size = dims[-1]
    max_dim = max(dims + (in_size,))

    # ---- batch tiling -------------------------------------------------------
    if batch_tile is None:
        if B_orig <= 128:
            batch_tile = B_orig                      # single tile == full extent
        else:
            # >= 2 tiles so dimension_semantics=("parallel",) can shard the
            # batch across v7x's two TensorCores; cap at 1024 rows so v5e/v6e
            # run few, fat steps (amortizes ~0.35us per-step overhead).
            half = -(-B_orig // 2)
            batch_tile = min(1024, ((half + 127) // 128) * 128)
    batch_tile = int(batch_tile)
    B = ((B_orig + batch_tile - 1) // batch_tile) * batch_tile
    num_tiles = B // batch_tile
    if num_tiles > 1:
        # Non-full-extent last dim of the x/out blocks must be 128-aligned.
        assert batch_tile % 128 == 0, (
            "batch_tile must be a multiple of 128 when the batch is tiled")

    # ---- kernel-friendly layout ---------------------------------------------
    # Feature-major input (in_size, B): batch on the lane axis, contiguous DMA.
    xT = state.astype(jnp.float32).T
    if B != B_orig:
        xT = jnp.pad(xT, ((0, 0), (0, B - B_orig)))

    # Weights stay in PyTorch's (out, in) layout; optional low-precision cast.
    wk = [w if w.dtype == weight_dtype else w.astype(weight_dtype)
          for w in (w1, w2, w3, w4)]

    # Biases packed (max_dim, 4): column l = layer l's bias, so the in-kernel
    # bias add is a lane broadcast of b_ref[:d, l:l+1].
    def _pad_bias(b):
        b = b.reshape(-1).astype(jnp.float32)
        return jnp.pad(b, (0, max_dim - b.shape[0]))

    b_packed = jnp.stack(
        [_pad_bias(b1), _pad_bias(b2), _pad_bias(b3), _pad_bias(b4)], axis=1)

    # ---- VMEM budget (padded tiles, explicit buffer counts) ------------------
    try:
        vmem_cap = int(pltpu.get_tpu_info().vmem_capacity_bytes)
    except Exception:
        vmem_cap = 64 << 20                      # conservative: v7x per-core VMEM
    # Leave headroom for compiler-internal scratch: ~56 MiB on v7x, ~112 MiB on
    # v5e/v6e (128 MiB parts).
    vmem_cap_usable = min(vmem_cap - (8 << 20), int(vmem_cap * 0.875))

    def _need(weight_buffers):
        wbytes = sum(_padded_tile_bytes(w.shape, w.dtype.itemsize) for w in wk)
        bbytes = _padded_tile_bytes(b_packed.shape, 4)
        xbytes = _padded_tile_bytes((in_size, batch_tile), 4)
        obytes = _padded_tile_bytes((out_size, batch_tile), 4)
        abytes = _padded_tile_bytes((max_dim, batch_tile), 4)
        return (weight_buffers * (wbytes + bbytes)   # resident parameters
                + 2 * (xbytes + obytes)              # double-buffered x / out
                + 4 * abytes)                        # live intermediates

    def _build(weight_mode):
        weight_buffers = 1 if weight_mode is not None else 2
        need = _need(weight_buffers)
        if need > vmem_cap_usable:
            # TODO(synk): for weights this wide a K-tiled accumulator path
            # (grid over the feature axis + pl.when init/finalize) is needed;
            # far beyond this module's sizes, so not implemented here.
            raise ValueError(
                f"hidden sizes too large for the resident-weight path: need "
                f"{need >> 20} MiB VMEM, usable {vmem_cap_usable >> 20} MiB")
        vmem_limit = int(min(max(int(need * 1.25), 16 << 20), vmem_cap_usable))

        def wspec(arr):
            if weight_mode is None:
                return pl.BlockSpec(arr.shape, lambda i: (0, 0))
            return pl.BlockSpec(arr.shape, lambda i: (0, 0),
                                pipeline_mode=weight_mode)

        return pl.pallas_call(
            _critic_kernel,
            out_shape=jax.ShapeDtypeStruct((out_size, B), jnp.float32),
            grid_spec=pltpu.PrefetchScalarGridSpec(
                num_scalar_prefetch=0,
                grid=(num_tiles,),
                in_specs=[
                    pl.BlockSpec((in_size, batch_tile), lambda i: (0, i)),
                    wspec(wk[0]), wspec(wk[1]), wspec(wk[2]), wspec(wk[3]),
                    wspec(b_packed),
                ],
                out_specs=pl.BlockSpec((out_size, batch_tile), lambda i: (0, i)),
            ),
            compiler_params=pltpu.CompilerParams(
                dimension_semantics=("parallel",),
                vmem_limit_bytes=vmem_limit,
            ),
        )

    # Grid-invariant weights/bias only need one VMEM buffer.  pl.Buffered(1)
    # support varies across Pallas versions, so fall back to the (known-good)
    # default double-buffered pipeline if it is rejected.
    try:
        out_t = _build(pl.Buffered(1))(xT, *wk, b_packed)
    except ValueError:
        raise
    except Exception:
        out_t = _build(None)(xT, *wk, b_packed)

    # (out_size, B) -> (B, out_size), drop batch padding.
    return out_t.T[:B_orig]


def init_params(key, input_size, h1, h2, h3, output_size):
    """PyTorch nn.Linear default init; weights in PyTorch (out, in) layout."""
    sizes = [(input_size, h1), (h1, h2), (h2, h3), (h3, output_size)]
    params = []
    keys = jax.random.split(key, 2 * len(sizes))
    for idx, (fan_in, fan_out) in enumerate(sizes):
        bound = 1.0 / math.sqrt(fan_in)
        w = jax.random.uniform(keys[2 * idx], (fan_out, fan_in),
                               jnp.float32, -bound, bound)
        b = jax.random.uniform(keys[2 * idx + 1], (fan_out,),
                               jnp.float32, -bound, bound)
        params += [w, b]
    return tuple(params)


def _reference_forward(state, params):
    w1, b1, w2, b2, w3, b3, w4, b4 = params
    h = jnp.maximum(state @ w1.T + b1, 0.0)
    h = jnp.maximum(h @ w2.T + b2, 0.0)
    h = jnp.maximum(h @ w3.T + b3, 0.0)
    return h @ w4.T + b4


if __name__ == "__main__":
    # Critic maps a small state vector to a scalar value.
    input_size, h1, h2, h3, output_size = 16, 32, 32, 32, 1
    batch = 256

    key = jax.random.PRNGKey(0)
    k_param, k_state = jax.random.split(key)
    params = init_params(k_param, input_size, h1, h2, h3, output_size)
    state = jax.random.normal(k_state, (batch, input_size), jnp.float32)

    ref = _reference_forward(state, params)

    # 1) Default path: f32 weights, two 128-row tiles -> exercises the
    #    pipelined / megacore-parallel grid and the feature-major layout.
    val = jax.block_until_ready(critical_network_forward(state, params))
    assert val.shape == (batch, output_size)
    assert jnp.allclose(val, ref, atol=1e-4, rtol=1e-4), "f32 path mismatch"

    # 2) Small batch: single full-extent tile path.
    small = state[:96]
    val_small = jax.block_until_ready(critical_network_forward(small, params))
    assert val_small.shape == (96, output_size)
    assert jnp.allclose(val_small, ref[:96], atol=1e-4, rtol=1e-4), \
        "small-batch path mismatch"

    # 3) Optional low-precision weights (only worthwhile for multi-MiB layers).
    val_bf16 = jax.block_until_ready(
        critical_network_forward(state, params, weight_dtype=jnp.bfloat16))
    rel_err = jnp.max(jnp.abs(val_bf16 - ref)) / (jnp.max(jnp.abs(ref)) + 1e-6)
    assert rel_err < 5e-2, f"bf16 path relative error too large: {rel_err}"

    print("KERNEL_OK")
</pallas_src>

<mosaic_0001>
module attributes {stable_mosaic.version = 11 : i64} {
  func.func @_critic_kernel(%arg0: i32, %arg1: memref<16x128xf32, #tpu.memory_space<vmem>>, %arg2: memref<32x16xf32, #tpu.memory_space<vmem>>, %arg3: memref<32x32xf32, #tpu.memory_space<vmem>>, %arg4: memref<32x32xf32, #tpu.memory_space<vmem>>, %arg5: memref<1x32xf32, #tpu.memory_space<vmem>>, %arg6: memref<32x4xf32, #tpu.memory_space<vmem>>, %arg7: memref<1x128xf32, #tpu.memory_space<vmem>>) attributes {dimension_semantics = [#tpu.dimension_semantics<parallel>], iteration_bounds = array<i64: 2>, scalar_prefetch = 0 : i64, scratch_operands = 0 : i64, tpu.core_type = #tpu.core_type<tc>, window_params = [{transform_indices = @transform_0, window_bounds = array<i64: 16, 128>}, {pipeline_mode = #tpu.pipeline_mode<synchronous>, transform_indices = @transform_1, window_bounds = array<i64: 32, 16>}, {pipeline_mode = #tpu.pipeline_mode<synchronous>, transform_indices = @transform_2, window_bounds = array<i64: 32, 32>}, {pipeline_mode = #tpu.pipeline_mode<synchronous>, transform_indices = @transform_3, window_bounds = array<i64: 32, 32>}, {pipeline_mode = #tpu.pipeline_mode<synchronous>, transform_indices = @transform_4, window_bounds = array<i64: 1, 32>}, {pipeline_mode = #tpu.pipeline_mode<synchronous>, transform_indices = @transform_5, window_bounds = array<i64: 32, 4>}, {transform_indices = @transform_6, window_bounds = array<i64: 1, 128>}]} {
    %c0 = arith.constant 0 : index
    %c0_0 = arith.constant 0 : index
    %0 = vector.load %arg2[%c0, %c0_0] : memref<32x16xf32, #tpu.memory_space<vmem>>, vector<32x16xf32>
    %c0_1 = arith.constant 0 : index
    %c0_2 = arith.constant 0 : index
    %1 = vector.load %arg1[%c0_1, %c0_2] : memref<16x128xf32, #tpu.memory_space<vmem>>, vector<16x128xf32>
    %cst = arith.constant dense<0.000000e+00> : vector<32x128xf32>
    %2 = tpu.matmul %0, %1, %cst {dimension_numbers = #tpu.dot_dimension_numbers<[1], [0], [0], [1], [0, 0, 1, 1], [], []>} : vector<32x16xf32>, vector<16x128xf32>, vector<32x128xf32> -> vector<32x128xf32>
    %c0_3 = arith.constant 0 : index
    %c0_4 = arith.constant 0 : index
    %3 = vector.load %arg6[%c0_3, %c0_4] : memref<32x4xf32, #tpu.memory_space<vmem>>, vector<32x1xf32>
    %4 = vector.broadcast %3 : vector<32x1xf32> to vector<32x128xf32>
    %5 = arith.addf %2, %4 : vector<32x128xf32>
    %cst_5 = arith.constant 0.000000e+00 : f32
    %6 = vector.broadcast %cst_5 : f32 to vector<32x128xf32>
    %7 = arith.maximumf %5, %6 : vector<32x128xf32>
    %c0_6 = arith.constant 0 : index
    %c0_7 = arith.constant 0 : index
    %8 = vector.load %arg3[%c0_6, %c0_7] : memref<32x32xf32, #tpu.memory_space<vmem>>, vector<32x32xf32>
    %cst_8 = arith.constant dense<0.000000e+00> : vector<32x128xf32>
    %9 = tpu.matmul %8, %7, %cst_8 {dimension_numbers = #tpu.dot_dimension_numbers<[1], [0], [0], [1], [0, 0, 1, 1], [], []>} : vector<32x32xf32>, vector<32x128xf32>, vector<32x128xf32> -> vector<32x128xf32>
    %c0_9 = arith.constant 0 : index
    %c1 = arith.constant 1 : index
    %10 = vector.load %arg6[%c0_9, %c1] : memref<32x4xf32, #tpu.memory_space<vmem>>, vector<32x1xf32>
    %11 = vector.broadcast %10 : vector<32x1xf32> to vector<32x128xf32>
    %12 = arith.addf %9, %11 : vector<32x128xf32>
    %cst_10 = arith.constant 0.000000e+00 : f32
    %13 = vector.broadcast %cst_10 : f32 to vector<32x128xf32>
    %14 = arith.maximumf %12, %13 : vector<32x128xf32>
    %c0_11 = arith.constant 0 : index
    %c0_12 = arith.constant 0 : index
    %15 = vector.load %arg4[%c0_11, %c0_12] : memref<32x32xf32, #tpu.memory_space<vmem>>, vector<32x32xf32>
    %cst_13 = arith.constant dense<0.000000e+00> : vector<32x128xf32>
    %16 = tpu.matmul %15, %14, %cst_13 {dimension_numbers = #tpu.dot_dimension_numbers<[1], [0], [0], [1], [0, 0, 1, 1], [], []>} : vector<32x32xf32>, vector<32x128xf32>, vector<32x128xf32> -> vector<32x128xf32>
    %c0_14 = arith.constant 0 : index
    %c2 = arith.constant 2 : index
    %17 = vector.load %arg6[%c0_14, %c2] : memref<32x4xf32, #tpu.memory_space<vmem>>, vector<32x1xf32>
    %18 = vector.broadcast %17 : vector<32x1xf32> to vector<32x128xf32>
    %19 = arith.addf %16, %18 : vector<32x128xf32>
    %cst_15 = arith.constant 0.000000e+00 : f32
    %20 = vector.broadcast %cst_15 : f32 to vector<32x128xf32>
    %21 = arith.maximumf %19, %20 : vector<32x128xf32>
    %c0_16 = arith.constant 0 : index
    %c0_17 = arith.constant 0 : index
    %22 = vector.load %arg5[%c0_16, %c0_17] : memref<1x32xf32, #tpu.memory_space<vmem>>, vector<1x32xf32>
    %cst_18 = arith.constant dense<0.000000e+00> : vector<1x128xf32>
    %23 = tpu.matmul %22, %21, %cst_18 {dimension_numbers = #tpu.dot_dimension_numbers<[1], [0], [0], [1], [0, 0, 1, 1], [], []>} : vector<1x32xf32>, vector<32x128xf32>, vector<1x128xf32> -> vector<1x128xf32>
    %c0_19 = arith.constant 0 : index
    %c3 = arith.constant 3 : index
    %24 = vector.load %arg6[%c0_19, %c3] : memref<32x4xf32, #tpu.memory_space<vmem>>, vector<1x1xf32>
    %25 = vector.broadcast %24 : vector<1x1xf32> to vector<1x128xf32>
    %26 = arith.addf %23, %25 : vector<1x128xf32>
    %c0_20 = arith.constant 0 : index
    %c0_21 = arith.constant 0 : index
    %27 = vector.load %arg7[%c0_20, %c0_21] : memref<1x128xf32, #tpu.memory_space<vmem>>, vector<1x128xf32>
    tpu.vector_store %arg7[%c0_20, %c0_21], %26 {strides = array<i32>} : memref<1x128xf32, #tpu.memory_space<vmem>>, vector<1x128xf32>,
    return
  }
  func.func @transform_0(%arg0: i32) -> (i32, i32) {
    %c0_i32 = arith.constant 0 : i32
    %c0_i32_0 = arith.constant 0 : i32
    return %c0_i32, %arg0 : i32, i32
  }
  func.func @transform_1(%arg0: i32) -> (i32, i32) {
    %c0_i32 = arith.constant 0 : i32
    %c0_i32_0 = arith.constant 0 : i32
    %c0_i32_1 = arith.constant 0 : i32
    return %c0_i32, %c0_i32_0 : i32, i32
  }
  func.func @transform_2(%arg0: i32) -> (i32, i32) {
    %c0_i32 = arith.constant 0 : i32
    %c0_i32_0 = arith.constant 0 : i32
    %c0_i32_1 = arith.constant 0 : i32
    return %c0_i32, %c0_i32_0 : i32, i32
  }
  func.func @transform_3(%arg0: i32) -> (i32, i32) {
    %c0_i32 = arith.constant 0 : i32
    %c0_i32_0 = arith.constant 0 : i32
    %c0_i32_1 = arith.constant 0 : i32
    return %c0_i32, %c0_i32_0 : i32, i32
  }
  func.func @transform_4(%arg0: i32) -> (i32, i32) {
    %c0_i32 = arith.constant 0 : i32
    %c0_i32_0 = arith.constant 0 : i32
    %c0_i32_1 = arith.constant 0 : i32
    return %c0_i32, %c0_i32_0 : i32, i32
  }
  func.func @transform_5(%arg0: i32) -> (i32, i32) {
    %c0_i32 = arith.constant 0 : i32
    %c0_i32_0 = arith.constant 0 : i32
    %c0_i32_1 = arith.constant 0 : i32
    return %c0_i32, %c0_i32_0 : i32, i32
  }
  func.func @transform_6(%arg0: i32) -> (i32, i32) {
    %c0_i32 = arith.constant 0 : i32
    %c0_i32_0 = arith.constant 0 : i32
    return %c0_i32, %arg0 : i32, i32
  }
}

module attributes {stable_mosaic.version = 11 : i64} {
  func.func @_critic_kernel(%arg0: i32, %arg1: memref<16x128xf32, #tpu.memory_space<vmem>>, %arg2: memref<32x16xf32, #tpu.memory_space<vmem>>, %arg3: memref<32x32xf32, #tpu.memory_space<vmem>>, %arg4: memref<32x32xf32, #tpu.memory_space<vmem>>, %arg5: memref<1x32xf32, #tpu.memory_space<vmem>>, %arg6: memref<32x4xf32, #tpu.memory_space<vmem>>, %arg7: memref<1x128xf32, #tpu.memory_space<vmem>>) attributes {dimension_semantics = [#tpu.dimension_semantics<parallel>], iteration_bounds = array<i64: 2>, scalar_prefetch = 0 : i64, scratch_operands = 0 : i64, tpu.core_type = #tpu.core_type<tc>, window_params = [{transform_indices = @transform_0, window_bounds = array<i64: 16, 128>}, {pipeline_mode = #tpu.pipeline_mode<synchronous>, transform_indices = @transform_1, window_bounds = array<i64: 32, 16>}, {pipeline_mode = #tpu.pipeline_mode<synchronous>, transform_indices = @transform_2, window_bounds = array<i64: 32, 32>}, {pipeline_mode = #tpu.pipeline_mode<synchronous>, transform_indices = @transform_3, window_bounds = array<i64: 32, 32>}, {pipeline_mode = #tpu.pipeline_mode<synchronous>, transform_indices = @transform_4, window_bounds = array<i64: 1, 32>}, {pipeline_mode = #tpu.pipeline_mode<synchronous>, transform_indices = @transform_5, window_bounds = array<i64: 32, 4>}, {transform_indices = @transform_6, window_bounds = array<i64: 1, 128>}]} {
    %c0 = arith.constant 0 : index
    %c0_0 = arith.constant 0 : index
    %0 = vector.load %arg2[%c0, %c0_0] : memref<32x16xf32, #tpu.memory_space<vmem>>, vector<32x16xf32>
    %c0_1 = arith.constant 0 : index
    %c0_2 = arith.constant 0 : index
    %1 = vector.load %arg1[%c0_1, %c0_2] : memref<16x128xf32, #tpu.memory_space<vmem>>, vector<16x128xf32>
    %cst = arith.constant dense<0.000000e+00> : vector<32x128xf32>
    %2 = tpu.matmul %0, %1, %cst {dimension_numbers = #tpu.dot_dimension_numbers<[1], [0], [0], [1], [0, 0, 1, 1], [], []>} : vector<32x16xf32>, vector<16x128xf32>, vector<32x128xf32> -> vector<32x128xf32>
    %c0_3 = arith.constant 0 : index
    %c0_4 = arith.constant 0 : index
    %3 = vector.load %arg6[%c0_3, %c0_4] : memref<32x4xf32, #tpu.memory_space<vmem>>, vector<32x1xf32>
    %4 = vector.broadcast %3 : vector<32x1xf32> to vector<32x128xf32>
    %5 = arith.addf %2, %4 : vector<32x128xf32>
    %cst_5 = arith.constant 0.000000e+00 : f32
    %6 = vector.broadcast %cst_5 : f32 to vector<32x128xf32>
    %7 = arith.maximumf %5, %6 : vector<32x128xf32>
    %c0_6 = arith.constant 0 : index
    %c0_7 = arith.constant 0 : index
    %8 = vector.load %arg3[%c0_6, %c0_7] : memref<32x32xf32, #tpu.memory_space<vmem>>, vector<32x32xf32>
    %cst_8 = arith.constant dense<0.000000e+00> : vector<32x128xf32>
    %9 = tpu.matmul %8, %7, %cst_8 {dimension_numbers = #tpu.dot_dimension_numbers<[1], [0], [0], [1], [0, 0, 1, 1], [], []>} : vector<32x32xf32>, vector<32x128xf32>, vector<32x128xf32> -> vector<32x128xf32>
    %c0_9 = arith.constant 0 : index
    %c1 = arith.constant 1 : index
    %10 = vector.load %arg6[%c0_9, %c1] : memref<32x4xf32, #tpu.memory_space<vmem>>, vector<32x1xf32>
    %11 = vector.broadcast %10 : vector<32x1xf32> to vector<32x128xf32>
    %12 = arith.addf %9, %11 : vector<32x128xf32>
    %cst_10 = arith.constant 0.000000e+00 : f32
    %13 = vector.broadcast %cst_10 : f32 to vector<32x128xf32>
    %14 = arith.maximumf %12, %13 : vector<32x128xf32>
    %c0_11 = arith.constant 0 : index
    %c0_12 = arith.constant 0 : index
    %15 = vector.load %arg4[%c0_11, %c0_12] : memref<32x32xf32, #tpu.memory_space<vmem>>, vector<32x32xf32>
    %cst_13 = arith.constant dense<0.000000e+00> : vector<32x128xf32>
    %16 = tpu.matmul %15, %14, %cst_13 {dimension_numbers = #tpu.dot_dimension_numbers<[1], [0], [0], [1], [0, 0, 1, 1], [], []>} : vector<32x32xf32>, vector<32x128xf32>, vector<32x128xf32> -> vector<32x128xf32>
    %c0_14 = arith.constant 0 : index
    %c2 = arith.constant 2 : index
    %17 = vector.load %arg6[%c0_14, %c2] : memref<32x4xf32, #tpu.memory_space<vmem>>, vector<32x1xf32>
    %18 = vector.broadcast %17 : vector<32x1xf32> to vector<32x128xf32>
    %19 = arith.addf %16, %18 : vector<32x128xf32>
    %cst_15 = arith.constant 0.000000e+00 : f32
    %20 = vector.broadcast %cst_15 : f32 to vector<32x128xf32>
    %21 = arith.maximumf %19, %20 : vector<32x128xf32>
    %c0_16 = arith.constant 0 : index
    %c0_17 = arith.constant 0 : index
    %22 = vector.load %arg5[%c0_16, %c0_17] : memref<1x32xf32, #tpu.memory_space<vmem>>, vector<1x32xf32>
    %cst_18 = arith.constant dense<0.000000e+00> : vector<1x128xf32>
    %23 = tpu.matmul %22, %21, %cst_18 {dimension_numbers = #tpu.dot_dimension_numbers<[1], [0], [0], [1], [0, 0, 1, 1], [], []>} : vector<1x32xf32>, vector<32x128xf32>, vector<1x128xf32> -> vector<1x128xf32>
    %c0_19 = arith.constant 0 : index
    %c3 = arith.constant 3 : index
    %24 = vector.load %arg6[%c0_19, %c3] : memref<32x4xf32, #tpu.memory_space<vmem>>, vector<1x1xf32>
    %25 = vector.broadcast %24 : vector<1x1xf32> to vector<1x128xf32>
    %26 = arith.addf %23, %25 : vector<1x128xf32>
    %c0_20 = arith.constant 0 : index
    %c0_21 = arith.constant 0 : index
    %27 = vector.load %arg7[%c0_20, %c0_21] : memref<1x128xf32, #tpu.memory_space<vmem>>, vector<1x128xf32>
    tpu.vector_store %arg7[%c0_20, %c0_21], %26 {strides = array<i32>} : memref<1x128xf32, #tpu.memory_space<vmem>>, vector<1x128xf32>,
    return
  }
  func.func @transform_0(%arg0: i32) -> (i32, i32) {
    %c0_i32 = arith.constant 0 : i32
    %c0_i32_0 = arith.constant 0 : i32
    return %c0_i32, %arg0 : i32, i32
  }
  func.func @transform_1(%arg0: i32) -> (i32, i32) {
    %c0_i32 = arith.constant 0 : i32
    %c0_i32_0 = arith.constant 0 : i32
    %c0_i32_1 = arith.constant 0 : i32
    return %c0_i32, %c0_i32_0 : i32, i32
  }
  func.func @transform_2(%arg0: i32) -> (i32, i32) {
    %c0_i32 = arith.constant 0 : i32
    %c0_i32_0 = arith.constant 0 : i32
    %c0_i32_1 = arith.constant 0 : i32
    return %c0_i32, %c0_i32_0 : i32, i32
  }
  func.func @transform_3(%arg0: i32) -> (i32, i32) {
    %c0_i32 = arith.constant 0 : i32
    %c0_i32_0 = arith.constant 0 : i32
    %c0_i32_1 = arith.constant 0 : i32
    return %c0_i32, %c0_i32_0 : i32, i32
  }
  func.func @transform_4(%arg0: i32) -> (i32, i32) {
    %c0_i32 = arith.constant 0 : i32
    %c0_i32_0 = arith.constant 0 : i32
    %c0_i32_1 = arith.constant 0 : i32
    return %c0_i32, %c0_i32_0 : i32, i32
  }
  func.func @transform_5(%arg0: i32) -> (i32, i32) {
    %c0_i32 = arith.constant 0 : i32
    %c0_i32_0 = arith.constant 0 : i32
    %c0_i32_1 = arith.constant 0 : i32
    return %c0_i32, %c0_i32_0 : i32, i32
  }
  func.func @transform_6(%arg0: i32) -> (i32, i32) {
    %c0_i32 = arith.constant 0 : i32
    %c0_i32_0 = arith.constant 0 : i32
    return %c0_i32, %arg0 : i32, i32
  }
}

</mosaic_0001>

<llo_original>
// kernel: tpu_custom_call.1
$region0: #{tpu_custom_call.1}
  #allocation0 [shape = 'u32[]', space=smem, size = 0x4, offset = 0x4, fixed_abs, tag = 'smem constant byte address 0x4 - core index']
  #allocation1 [shape = 'u32[72,128]{1,0:T(1,128)}', space=vmem, size = 0x9000, scoped, tag = 'internal scratch']
  %s0 = inlined_call_operand.vmem [shape: f32[16,256], index: 0, kind: input, shape index: {}]
  %s1 = inlined_call_operand.vmem [shape: f32[32,16], index: 1, kind: input, shape index: {}]
  %s2 = inlined_call_operand.vmem [shape: f32[32,32], index: 2, kind: input, shape index: {}]
  %s3 = inlined_call_operand.hbm [shape: f32[32,32], index: 3, kind: input, shape index: {}]
  %s4 = inlined_call_operand.vmem [shape: f32[1,32], index: 4, kind: input, shape index: {}]
  %s5 = inlined_call_operand.vmem [shape: f32[32,4], index: 5, kind: input, shape index: {}]
  %s6 = inlined_call_operand.hbm [shape: f32[1,256], index: 6, kind: output, shape index: {}]
  %s7 = sld [smem:[#allocation0]]
  $region99: #{tpu_custom_call.1} parent=0
    _
  %s9 = ssub.s32 1, %s7
  %s10 = scalar_select 0, %s9, %s7
  $region1: #{tpu_custom_call.1} parent=0
    #allocation2 [shape = 'u8[16384]{0}', space=vmem, size = 0x4000, scoped, tag = 'input window, operand 0']
    #allocation3 [shape = 'u8[16384]{0}', space=vmem, size = 0x4000, scoped, tag = 'input window, operand 3, single buffered']
    #allocation4 [shape = 's32[2]{0}', space=sflag, size = 0x8, scoped, tag = 'scoped memory for tpu_custom_call.1']
    #allocation5 [shape = 's32[2]{0}', space=sflag, size = 0x8, scoped, tag = 'scoped memory for tpu_custom_call.1']
    #allocation6 [shape = 'u8[1024]{0}', space=vmem, size = 0x400, scoped, tag = 'output window, operand 0']
    %11 = vsyncpa [#allocation4], 0
    %12 = vsyncpa [#allocation5], 0
    %s13 = scalar_lea.sflag [#allocation5], 1
    %14 = vsyncpa %s13, 0
    loop: start=0, step=1, limit=4
    $region2: #{tpu_custom_call.1} parent=1 // loop_pre_header
      _
    $region3: #{tpu_custom_call.1} parent=1 // loop_header
      %s16 = sphi 0, %s20
      %p17 = scmp.ge.s32.totalorder %s16, 4
      %s26 = sphi 0, %s28
      %s29 = sphi 0, %s26
      %s30 = sphi 0, %s29
      %s46 = sphi 0, %s30
      %s50 = sphi 0, %s50
      %s52 = sphi 0, %s50
      %s53 = sphi 0, %s52
      %s67 = sphi 0, %s53
      %s71 = sphi 0, %s71
      %s73 = sphi 0, %s71
      %s74 = sphi 0, %s73
      %s88 = sphi 0, %s74
      %s92 = sphi 0, %s92
      %s94 = sphi 0, %s92
      %s95 = sphi 0, %s94
      %s109 = sphi 0, %s95
      %s113 = sphi 0, %s113
      %s115 = sphi 0, %s113
      %s116 = sphi 0, %s115
      %s130 = sphi 0, %s116
      %s134 = sphi 0, %s134
      %s136 = sphi 0, %s134
      %s137 = sphi 0, %s136
      %s151 = sphi 0, %s137
      %s157 = sphi 0, %s159
      %s160 = sphi 0, %s157
      %s161 = sphi 0, %s160
      %s177 = sphi 0, %s161
    $region4: #{tpu_custom_call.1} parent=1 // loop_header_branch
      %19 = sbr.rel (%p17) target = $region8
    $region5: #{tpu_custom_call.1} parent=1 // loop_body
      %s21 = ssub.s32 %s16, 1
      %s22 = ssub.s32 %s16, 2
      %s23 = sadd.s32 %s16, 1
      %s24 = ssub.s32 %s16, %s23
      %p25 = scmp.eq.s32.totalorder %s24, 0
      %s27 = sadd.s32 %s26, 1
      %s28 = scalar_select %p25, %s26, %s27
      %p31 = pneg %p25
      %p32 = scmp.eq.s32.totalorder %s16, 1
      %p33 = por %p31, %p32
      %p34 = scmp.ne.s32.totalorder %s26, %s29
      %p35 = scmp.eq.s32.totalorder %s16, 0
      %p36 = por %p34, %p35
      %p37 = scmp.ne.s32.totalorder %s26, %s29
      %p38 = scmp.eq.s32.totalorder %s21, 1
      %p39 = por %p37, %p38
      %p40 = scmp.ne.s32.totalorder %s29, %s30
      %p41 = scmp.eq.s32.totalorder %s21, 0
      %p42 = por %p40, %p41
      %p43 = scmp.ne.s32.totalorder %s29, %s30
      %p44 = scmp.eq.s32.totalorder %s22, 1
      %p45 = por %p43, %p44
      %p47 = scmp.ne.s32.totalorder %s30, %s46
      %p48 = scmp.eq.s32.totalorder %s22, 0
      %p49 = por %p47, %p48
      %s51 = sadd.s32 %s50, 1
      %p54 = scmp.eq.s32.totalorder %s16, 1
      %p55 = scmp.ne.s32.totalorder %s50, %s52
      %p56 = scmp.eq.s32.totalorder %s16, 0
      %p57 = por %p55, %p56
      %p58 = scmp.ne.s32.totalorder %s50, %s52
      %p59 = scmp.eq.s32.totalorder %s21, 1
      %p60 = por %p58, %p59
      %p61 = scmp.ne.s32.totalorder %s52, %s53
      %p62 = scmp.eq.s32.totalorder %s21, 0
      %p63 = por %p61, %p62
      %p64 = scmp.ne.s32.totalorder %s52, %s53
      %p65 = scmp.eq.s32.totalorder %s22, 1
      %p66 = por %p64, %p65
      %p68 = scmp.ne.s32.totalorder %s53, %s67
      %p69 = scmp.eq.s32.totalorder %s22, 0
      %p70 = por %p68, %p69
      %s72 = sadd.s32 %s71, 1
      %p75 = scmp.eq.s32.totalorder %s16, 1
      %p76 = scmp.ne.s32.totalorder %s71, %s73
      %p77 = scmp.eq.s32.totalorder %s16, 0
      %p78 = por %p76, %p77
      %p79 = scmp.ne.s32.totalorder %s71, %s73
      %p80 = scmp.eq.s32.totalorder %s21, 1
      %p81 = por %p79, %p80
      %p82 = scmp.ne.s32.totalorder %s73, %s74
      %p83 = scmp.eq.s32.totalorder %s21, 0
      %p84 = por %p82, %p83
      %p85 = scmp.ne.s32.totalorder %s73, %s74
      %p86 = scmp.eq.s32.totalorder %s22, 1
      %p87 = por %p85, %p86
      %p89 = scmp.ne.s32.totalorder %s74, %s88
      %p90 = scmp.eq.s32.totalorder %s22, 0
      %p91 = por %p89, %p90
      %s93 = sadd.s32 %s92, 1
      %p96 = scmp.eq.s32.totalorder %s16, 1
      %p97 = scmp.ne.s32.totalorder %s92, %s94
      %p98 = scmp.eq.s32.totalorder %s16, 0
      %p99 = por %p97, %p98
      %p100 = scmp.ne.s32.totalorder %s92, %s94
      %p101 = scmp.eq.s32.totalorder %s21, 1
      %p102 = por %p100, %p101
      %p103 = scmp.ne.s32.totalorder %s94, %s95
      %p104 = scmp.eq.s32.totalorder %s21, 0
      %p105 = por %p103, %p104
      %p106 = scmp.ne.s32.totalorder %s94, %s95
      %p107 = scmp.eq.s32.totalorder %s22, 1
      %p108 = por %p106, %p107
      %p110 = scmp.ne.s32.totalorder %s95, %s109
      %p111 = scmp.eq.s32.totalorder %s22, 0
      %p112 = por %p110, %p111
      %s114 = sadd.s32 %s113, 1
      %p117 = scmp.eq.s32.totalorder %s16, 1
      %p118 = scmp.ne.s32.totalorder %s113, %s115
      %p119 = scmp.eq.s32.totalorder %s16, 0
      %p120 = por %p118, %p119
      %p121 = scmp.ne.s32.totalorder %s113, %s115
      %p122 = scmp.eq.s32.totalorder %s21, 1
      %p123 = por %p121, %p122
      %p124 = scmp.ne.s32.totalorder %s115, %s116
      %p125 = scmp.eq.s32.totalorder %s21, 0
      %p126 = por %p124, %p125
      %p127 = scmp.ne.s32.totalorder %s115, %s116
      %p128 = scmp.eq.s32.totalorder %s22, 1
      %p129 = por %p127, %p128
      %p131 = scmp.ne.s32.totalorder %s116, %s130
      %p132 = scmp.eq.s32.totalorder %s22, 0
      %p133 = por %p131, %p132
      %s135 = sadd.s32 %s134, 1
      %p138 = scmp.eq.s32.totalorder %s16, 1
      %p139 = scmp.ne.s32.totalorder %s134, %s136
      %p140 = scmp.eq.s32.totalorder %s16, 0
      %p141 = por %p139, %p140
      %p142 = scmp.ne.s32.totalorder %s134, %s136
      %p143 = scmp.eq.s32.totalorder %s21, 1
      %p144 = por %p142, %p143
      %p145 = scmp.ne.s32.totalorder %s136, %s137
      %p146 = scmp.eq.s32.totalorder %s21, 0
      %p147 = por %p145, %p146
      %p148 = scmp.ne.s32.totalorder %s136, %s137
      %p149 = scmp.eq.s32.totalorder %s22, 1
      %p150 = por %p148, %p149
      %p152 = scmp.ne.s32.totalorder %s137, %s151
      %p153 = scmp.eq.s32.totalorder %s22, 0
      %p154 = por %p152, %p153
      %s155 = ssub.s32 %s16, %s23
      %p156 = scmp.eq.s32.totalorder %s155, 0
      %s158 = sadd.s32 %s157, 1
      %s159 = scalar_select %p156, %s157, %s158
      %p162 = pneg %p156
      %p163 = scmp.eq.s32.totalorder %s16, 1
      %p164 = por %p162, %p163
      %p165 = scmp.ne.s32.totalorder %s157, %s160
      %p166 = scmp.eq.s32.totalorder %s16, 0
      %p167 = por %p165, %p166
      %p168 = scmp.ne.s32.totalorder %s157, %s160
      %p169 = scmp.eq.s32.totalorder %s21, 1
      %p170 = por %p168, %p169
      %p171 = scmp.ne.s32.totalorder %s160, %s161
      %p172 = scmp.eq.s32.totalorder %s21, 0
      %p173 = por %p171, %p172
      %p174 = scmp.ne.s32.totalorder %s160, %s161
      %p175 = scmp.eq.s32.totalorder %s22, 1
      %p176 = por %p174, %p175
      %p178 = scmp.ne.s32.totalorder %s161, %s177
      %p179 = scmp.eq.s32.totalorder %s22, 0
      %p180 = por %p178, %p179
      %p181 = scmp.le.s32.totalorder 1, %s16
      %p182 = scmp.lt.s32.totalorder %s16, 3
      %p183 = pnand %p181, %p182
      %p184 = pneg %p183
      // Predicated region
      $region9: #{tpu_custom_call.1} parent=5 // pred_check
        _
      $region10: #{tpu_custom_call.1} parent=5 // pred_check_branch
        %186 = sbr.rel (%p183) target = $region12
      $region11: #{tpu_custom_call.1} parent=5 // pred_region
        %s187 = ssub.s32 %s16, 1
        // Predicated region
        $region13: #{tpu_custom_call.1} parent=11 // pred_check
          %p188 = pneg %p63
        $region14: #{tpu_custom_call.1} parent=11 // pred_check_branch
          %190 = sbr.rel (%p188) target = $region16
        $region15: #{tpu_custom_call.1} parent=11 // pred_region
          _
        $region16: #{tpu_custom_call.1} parent=11 // pred_fallthru
          _
        // Predicated region
        $region17: #{tpu_custom_call.1} parent=11 // pred_check
          %p191 = pneg %p84
        $region18: #{tpu_custom_call.1} parent=11 // pred_check_branch
          %193 = sbr.rel (%p191) target = $region20
        $region19: #{tpu_custom_call.1} parent=11 // pred_region
          _
        $region20: #{tpu_custom_call.1} parent=11 // pred_fallthru
          _
        // Predicated region
        $region21: #{tpu_custom_call.1} parent=11 // pred_check
          %p194 = pneg %p105
        $region22: #{tpu_custom_call.1} parent=11 // pred_check_branch
          %196 = sbr.rel (%p194) target = $region24
        $region23: #{tpu_custom_call.1} parent=11 // pred_region
          %198 = vsyncadd [#allocation4], 0
          %s199 = sshll.u32 %s3, 4
          %s200 = int_to_ptr.hbm [resolvable:$true] %s199
          %s201 = sshll.u32 [#allocation3], 4
          %s202 = int_to_ptr.vmem [resolvable:$true] %s201
          %207 = dma.hbm_to_vmem [thread:$0]  %s200, 512, %s202, [#allocation4], 128, 128, 8
        $region24: #{tpu_custom_call.1} parent=11 // pred_fallthru
          _
        // Predicated region
        $region25: #{tpu_custom_call.1} parent=11 // pred_check
          %p208 = pneg %p126
        $region26: #{tpu_custom_call.1} parent=11 // pred_check_branch
          %210 = sbr.rel (%p208) target = $region28
        $region27: #{tpu_custom_call.1} parent=11 // pred_region
          _
        $region28: #{tpu_custom_call.1} parent=11 // pred_fallthru
          _
        // Predicated region
        $region29: #{tpu_custom_call.1} parent=11 // pred_check
          %p211 = pneg %p147
        $region30: #{tpu_custom_call.1} parent=11 // pred_check_branch
          %213 = sbr.rel (%p211) target = $region32
        $region31: #{tpu_custom_call.1} parent=11 // pred_region
          _
        $region32: #{tpu_custom_call.1} parent=11 // pred_fallthru
          _
      $region12: #{tpu_custom_call.1} parent=5 // pred_fallthru
        _
      %p214 = scmp.lt.s32.totalorder %s16, 2
      // Predicated region
      $region33: #{tpu_custom_call.1} parent=5 // pred_check
        %p215 = pneg %p214
      $region34: #{tpu_custom_call.1} parent=5 // pred_check_branch
        %217 = sbr.rel (%p215) target = $region36
      $region35: #{tpu_custom_call.1} parent=5 // pred_region
        // Predicated region
        $region37: #{tpu_custom_call.1} parent=35 // pred_check
          %p218 = pneg %p36
        $region38: #{tpu_custom_call.1} parent=35 // pred_check_branch
          %220 = sbr.rel (%p218) target = $region40
        $region39: #{tpu_custom_call.1} parent=35 // pred_region
          %s221 = sand.u32 %s26, 1
          %s222 = sand.u32 %s26, 1
          %s223 = smul.addr %s222, 16
          %s224 = scalar_lea.vmem [#allocation2], %s223
          %s225 = smul.addr %s16, 8
          %s226 = scalar_lea.vmem %s0, %s225
          // Predicated region
          $region41: #{tpu_custom_call.1} parent=39 // pred_check
            _
          $region42: #{tpu_custom_call.1} parent=39 // pred_check_branch
            %228 = sbr.rel (0) target = $region44
          $region43: #{tpu_custom_call.1} parent=39 // pred_region
            // Predicated region
            $region45: #{tpu_custom_call.1} parent=43 // pred_check
              _
            $region46: #{tpu_custom_call.1} parent=43 // pred_check_branch
              %230 = sbr.rel (0) target = $region48
            $region47: #{tpu_custom_call.1} parent=43 // pred_region
              // Predicated region
              $region60: #{tpu_custom_call.1} parent=47 // pred_check
                _
              $region61: #{tpu_custom_call.1} parent=47 // pred_check_branch
                %248 = sbr.rel (0) target = $region63
              $region62: #{tpu_custom_call.1} parent=47 // pred_region
                loop: start=0, step=1, limit=1
                $region64: #{tpu_custom_call.1} parent=62 // loop_pre_header
                  _
                $region65: #{tpu_custom_call.1} parent=62 // loop_header
                  %s250 = sphi 0, %s254
                  %p251 = scmp.ge.s32.totalorder %s250, 1
                  %s255 = sphi %s226, %s226
                  %s256 = sphi %s224, %s224
                $region66: #{tpu_custom_call.1} parent=62 // loop_header_branch
                  %253 = sbr.rel (%p251) target = $region70
                $region67: #{tpu_custom_call.1} parent=62 // loop_body
                  %v257 = vld [vmem:[%s255] sm:$0xff]
                  %258 = vst [vmem:[%s256] sm:$0xff] %v257
                  %v259 = vld [vmem:[%s255 + $0x10] sm:$0xff]
                  %260 = vst [vmem:[%s256 + $0x8] sm:$0xff] %v259
                $region68: #{tpu_custom_call.1} parent=62 // loop_footer
                  %s254 = sadd.s32 1, %s250
                $region69: #{tpu_custom_call.1} parent=62 // loop_footer_branch
                  %249 = sbr.rel target = $region65
                $region70: #{tpu_custom_call.1} parent=62 // loop_exit
                  _
              $region63: #{tpu_custom_call.1} parent=47 // pred_fallthru
                _
              // Predicated region
              $region71: #{tpu_custom_call.1} parent=47 // pred_check
                _
              $region72: #{tpu_custom_call.1} parent=47 // pred_check_branch
                %262 = sbr.rel target = $region74
              $region73: #{tpu_custom_call.1} parent=47 // pred_region
                _
              $region74: #{tpu_custom_call.1} parent=47 // pred_fallthru
                _
            $region48: #{tpu_custom_call.1} parent=43 // pred_fallthru
              _
            // Predicated region
            $region49: #{tpu_custom_call.1} parent=43 // pred_check
              _
            $region50: #{tpu_custom_call.1} parent=43 // pred_check_branch
              %232 = sbr.rel target = $region52
            $region51: #{tpu_custom_call.1} parent=43 // pred_region
              %s234 = ssub.s32 256, 1
              loop: start=0, step=1, limit=1
              $region53: #{tpu_custom_call.1} parent=51 // loop_pre_header
                _
              $region54: #{tpu_custom_call.1} parent=51 // loop_header
                %s236 = sphi 0, %s240
                %p237 = scmp.ge.s32.totalorder %s236, 1
                %s241 = sphi %s226, %s226
                %s242 = sphi %s224, %s224
              $region55: #{tpu_custom_call.1} parent=51 // loop_header_branch
                %239 = sbr.rel (%p237) target = $region59
              $region56: #{tpu_custom_call.1} parent=51 // loop_body
                %v243 = vld [vmem:[%s241] sm:%s234]
                %244 = vst [vmem:[%s242] sm:%s234] %v243
                %v245 = vld [vmem:[%s241 + $0x10] sm:%s234]
                %246 = vst [vmem:[%s242 + $0x8] sm:%s234] %v245
              $region57: #{tpu_custom_call.1} parent=51 // loop_footer
                %s240 = sadd.s32 1, %s236
              $region58: #{tpu_custom_call.1} parent=51 // loop_footer_branch
                %235 = sbr.rel target = $region54
              $region59: #{tpu_custom_call.1} parent=51 // loop_exit
                _
            $region52: #{tpu_custom_call.1} parent=43 // pred_fallthru
              _
          $region44: #{tpu_custom_call.1} parent=39 // pred_fallthru
            _
          %263 = vnop
        $region40: #{tpu_custom_call.1} parent=35 // pred_fallthru
          _
      $region36: #{tpu_custom_call.1} parent=5 // pred_fallthru
        _
      %p264 = scmp.le.s32.totalorder 1, %s16
      %p265 = scmp.lt.s32.totalorder %s16, 3
      %p266 = pnand %p264, %p265
      %p267 = pneg %p266
      // Predicated region
      $region75: #{tpu_custom_call.1} parent=5 // pred_check
        _
      $region76: #{tpu_custom_call.1} parent=5 // pred_check_branch
        %269 = sbr.rel (%p266) target = $region78
      $region77: #{tpu_custom_call.1} parent=5 // pred_region
        %s270 = ssub.s32 %s16, 1
        %s271 = sand.u32 %s29, 1
        %s272 = sand.u32 %s29, 1
        %s273 = smul.addr %s272, 16
        %s274 = scalar_lea.vmem [#allocation2], %s273
        // Predicated region
        $region79: #{tpu_custom_call.1} parent=77 // pred_check
          %p275 = pneg %p42
        $region80: #{tpu_custom_call.1} parent=77 // pred_check_branch
          %277 = sbr.rel (%p275) target = $region82
        $region81: #{tpu_custom_call.1} parent=77 // pred_region
          _
        $region82: #{tpu_custom_call.1} parent=77 // pred_fallthru
          _
        // Predicated region
        $region83: #{tpu_custom_call.1} parent=77 // pred_check
          %p278 = pneg %p105
        $region84: #{tpu_custom_call.1} parent=77 // pred_check_branch
          %280 = sbr.rel (%p278) target = $region86
        $region85: #{tpu_custom_call.1} parent=77 // pred_region
          %282 = dma.done [#allocation4], 512
        $region86: #{tpu_custom_call.1} parent=77 // pred_fallthru
          _
        %s283 = sand.u32 %s29, 1
        %s284 = sand.u32 %s29, 1
        %s285 = smul.addr %s284, 16
        %s286 = scalar_lea.vmem [#allocation2], %s285
        %p287 = pneg %p42
        %p288 = pneg %p39
        %p289 = pneg %p63
        %p290 = pneg %p60
        %p291 = pneg %p84
        %p292 = pneg %p81
        %p293 = pneg %p105
        %p294 = pneg %p102
        %p295 = pneg %p126
        %p296 = pneg %p123
        %p297 = pneg %p147
        %p298 = pneg %p144
        %p299 = pneg %p173
        %p300 = pneg %p170
        %s301 = sand.u32 %s160, 1
        %s302 = scalar_lea.sflag [#allocation5], %s301
        %s303 = sand.u32 %s160, 1
        %s304 = scalar_lea.vmem [#allocation6], %s303
        %v305 = vld [vmem:[%s1] sm:$0xff]
        %v306 = vld [vmem:[%s1 + $0x8] sm:$0xff]
        %v307 = vld [vmem:[%s1 + $0x10] sm:$0xff]
        %v308 = vld [vmem:[%s1 + $0x18] sm:$0xff]
        %v309 = vld [vmem:[%s274] sm:$0xff]
        %v310 = vld [vmem:[%s274 + $0x8] sm:$0xff]
        %v311 = vld [vmem:[%s5] sm:$0xff]
        %v312 = vld [vmem:[%s5 + $0x8] sm:$0xff]
        %v313 = vld [vmem:[%s5 + $0x10] sm:$0xff]
        %v314 = vld [vmem:[%s5 + $0x18] sm:$0xff]
        %316 = vset.pattern.permute.xlu0 0
        %317 = vperm.xlu0 %316, %v311
        %v318 = vpop.permute.xlu0 %317
        %321 = vset.pattern.permute.xlu0 0
        %322 = vperm.xlu0 %321, %v312
        %v323 = vpop.permute.xlu0 %322
        %326 = vset.pattern.permute.xlu0 0
        %327 = vperm.xlu0 %326, %v313
        %v328 = vpop.permute.xlu0 %327
        %331 = vset.pattern.permute.xlu0 0
        %332 = vperm.xlu0 %331, %v314
        %v333 = vpop.permute.xlu0 %332
        %vm335 = vcmask 130048
        %v337 = vsel %vm335, %v305, 0
        %v340 = vsel %vm335, %v306, 0
        %v343 = vsel %vm335, %v307, 0
        %v346 = vsel %vm335, %v308, 0
        %348 = vmatpush.msra.mxu0 0.0
        %349 = vmatpush.msra.mxu0 0.0
        %350 = vmatpush.msra.mxu0 0.0
        %351 = vmatpush.msra.mxu0 0.0
        %352 = vmatpush.msra.mxu0 0.0
        %353 = vmatpush.msra.mxu0 0.0
        %354 = vmatpush.msra.mxu0 0.0
        %355 = vmatpush.msra.mxu0 0.0
        %356 = vmatpush.msra.mxu0 0.0
        %357 = vmatpush.msra.mxu0 0.0
        %358 = vmatpush.msra.mxu0 0.0
        %359 = vmatpush.msra.mxu0 0.0
        %360 = vmatpush.msra.mxu0 0.0
        %361 = vmatpush.msra.mxu0 0.0
        %362 = vmatpush.msra.mxu0 %v310
        %363 = vmatpush.msra.mxu0 %v309
        %364 = vmatmul.f32.gmra.mxu0 %v337
        %v365 = vpop.f32.mrf.mxu0
        %v366 = vadd.f32 %v318, %v365
        %367 = vmatmul.f32.gmra.mxu0 %v340
        %v368 = vpop.f32.mrf.mxu0
        %v369 = vadd.f32 %v323, %v368
        %370 = vmatmul.f32.gmra.mxu0 %v343
        %v371 = vpop.f32.mrf.mxu0
        %v372 = vadd.f32 %v328, %v371
        %373 = vmatmul.f32.gmra.mxu0 %v346
        %v374 = vpop.f32.mrf.mxu0
        %v375 = vadd.f32 %v333, %v374
        %376 = vdwg.mxu0
        %v377 = vmax.f32 %v366, 0.0
        %v378 = vmax.f32 %v369, 0.0
        %v379 = vmax.f32 %v372, 0.0
        %v380 = vmax.f32 %v375, 0.0
        %v381 = vld [vmem:[%s2] sm:$0xff]
        %v382 = vld [vmem:[%s2 + $0x8] sm:$0xff]
        %v383 = vld [vmem:[%s2 + $0x10] sm:$0xff]
        %v384 = vld [vmem:[%s2 + $0x18] sm:$0xff]
        %385 = vset.pattern.permute.xlu0 1
        %386 = vperm.xlu0 %385, %v311
        %v387 = vpop.permute.xlu0 %386
        %389 = vset.pattern.permute.xlu0 1
        %390 = vperm.xlu0 %389, %v312
        %v391 = vpop.permute.xlu0 %390
        %393 = vset.pattern.permute.xlu0 1
        %394 = vperm.xlu0 %393, %v313
        %v395 = vpop.permute.xlu0 %394
        %397 = vset.pattern.permute.xlu0 1
        %398 = vperm.xlu0 %397, %v314
        %v399 = vpop.permute.xlu0 %398
        %vm401 = vcmask 261120
        %v403 = vsel %vm401, %v381, 0
        %v406 = vsel %vm401, %v382, 0
        %v409 = vsel %vm401, %v383, 0
        %v412 = vsel %vm401, %v384, 0
        %414 = vmatpush.msra.mxu0 0.0
        %415 = vmatpush.msra.mxu0 0.0
        %416 = vmatpush.msra.mxu0 0.0
        %417 = vmatpush.msra.mxu0 0.0
        %418 = vmatpush.msra.mxu0 0.0
        %419 = vmatpush.msra.mxu0 0.0
        %420 = vmatpush.msra.mxu0 0.0
        %421 = vmatpush.msra.mxu0 0.0
        %422 = vmatpush.msra.mxu0 0.0
        %423 = vmatpush.msra.mxu0 0.0
        %424 = vmatpush.msra.mxu0 0.0
        %425 = vmatpush.msra.mxu0 0.0
        %426 = vmatpush.msra.mxu0 %v380
        %427 = vmatpush.msra.mxu0 %v379
        %428 = vmatpush.msra.mxu0 %v378
        %429 = vmatpush.msra.mxu0 %v377
        %430 = vmatmul.f32.gmra.mxu0 %v403
        %v431 = vpop.f32.mrf.mxu0
        %v432 = vadd.f32 %v387, %v431
        %433 = vmatmul.f32.gmra.mxu0 %v406
        %v434 = vpop.f32.mrf.mxu0
        %v435 = vadd.f32 %v391, %v434
        %436 = vmatmul.f32.gmra.mxu0 %v409
        %v437 = vpop.f32.mrf.mxu0
        %v438 = vadd.f32 %v395, %v437
        %439 = vmatmul.f32.gmra.mxu0 %v412
        %v440 = vpop.f32.mrf.mxu0
        %v441 = vadd.f32 %v399, %v440
        %442 = vdwg.mxu0
        %v443 = vmax.f32 %v432, 0.0
        %v444 = vmax.f32 %v435, 0.0
        %v445 = vmax.f32 %v438, 0.0
        %v446 = vmax.f32 %v441, 0.0
        %v447 = vld [vmem:[#allocation3] sm:$0xff]
        %v448 = vld [vmem:[#allocation3 + $0x8] sm:$0xff]
        %v449 = vld [vmem:[#allocation3 + $0x10] sm:$0xff]
        %v450 = vld [vmem:[#allocation3 + $0x18] sm:$0xff]
        %451 = vset.pattern.permute.xlu0 2
        %452 = vperm.xlu0 %451, %v311
        %v453 = vpop.permute.xlu0 %452
        %455 = vset.pattern.permute.xlu0 2
        %456 = vperm.xlu0 %455, %v312
        %v457 = vpop.permute.xlu0 %456
        %459 = vset.pattern.permute.xlu0 2
        %460 = vperm.xlu0 %459, %v313
        %v461 = vpop.permute.xlu0 %460
        %463 = vset.pattern.permute.xlu0 2
        %464 = vperm.xlu0 %463, %v314
        %v465 = vpop.permute.xlu0 %464
        %v468 = vsel %vm401, %v447, 0
        %v471 = vsel %vm401, %v448, 0
        %v474 = vsel %vm401, %v449, 0
        %v477 = vsel %vm401, %v450, 0
        %479 = vmatpush.msra.mxu0 0.0
        %480 = vmatpush.msra.mxu0 0.0
        %481 = vmatpush.msra.mxu0 0.0
        %482 = vmatpush.msra.mxu0 0.0
        %483 = vmatpush.msra.mxu0 0.0
        %484 = vmatpush.msra.mxu0 0.0
        %485 = vmatpush.msra.mxu0 0.0
        %486 = vmatpush.msra.mxu0 0.0
        %487 = vmatpush.msra.mxu0 0.0
        %488 = vmatpush.msra.mxu0 0.0
        %489 = vmatpush.msra.mxu0 0.0
        %490 = vmatpush.msra.mxu0 0.0
        %491 = vmatpush.msra.mxu0 %v446
        %492 = vmatpush.msra.mxu0 %v445
        %493 = vmatpush.msra.mxu0 %v444
        %494 = vmatpush.msra.mxu0 %v443
        %495 = vmatmul.f32.gmra.mxu0 %v468
        %v496 = vpop.f32.mrf.mxu0
        %v497 = vadd.f32 %v453, %v496
        %498 = vmatmul.f32.gmra.mxu0 %v471
        %v499 = vpop.f32.mrf.mxu0
        %v500 = vadd.f32 %v457, %v499
        %501 = vmatmul.f32.gmra.mxu0 %v474
        %v502 = vpop.f32.mrf.mxu0
        %v503 = vadd.f32 %v461, %v502
        %504 = vmatmul.f32.gmra.mxu0 %v477
        %v505 = vpop.f32.mrf.mxu0
        %v506 = vadd.f32 %v465, %v505
        %507 = vdwg.mxu0
        %v508 = vmax.f32 %v497, 0.0
        %v509 = vmax.f32 %v500, 0.0
        %v510 = vmax.f32 %v503, 0.0
        %v511 = vmax.f32 %v506, 0.0
        %v512 = vld [vmem:[%s4] sm:$0x1]
        %v513 = vld [vmem:[%s5] sm:$0x1]
        %515 = vset.pattern.permute.xlu0 3
        %516 = vperm.xlu0 %515, %v513
        %v517 = vpop.permute.xlu0 %516
        %v520 = vsel %vm401, %v512, 0
        %522 = vmatpush.msra.mxu0 0.0
        %523 = vmatpush.msra.mxu0 0.0
        %524 = vmatpush.msra.mxu0 0.0
        %525 = vmatpush.msra.mxu0 0.0
        %526 = vmatpush.msra.mxu0 0.0
        %527 = vmatpush.msra.mxu0 0.0
        %528 = vmatpush.msra.mxu0 0.0
        %529 = vmatpush.msra.mxu0 0.0
        %530 = vmatpush.msra.mxu0 0.0
        %531 = vmatpush.msra.mxu0 0.0
        %532 = vmatpush.msra.mxu0 0.0
        %533 = vmatpush.msra.mxu0 0.0
        %534 = vmatpush.msra.mxu0 %v511
        %535 = vmatpush.msra.mxu0 %v510
        %536 = vmatpush.msra.mxu0 %v509
        %537 = vmatpush.msra.mxu0 %v508
        %538 = vmatmul.f32.gmra.mxu0 %v520
        %v539 = vpop.f32.mrf.mxu0
        %v540 = vadd.f32 %v517, %v539
        %541 = vdwg.mxu0
        %542 = vst [vmem:[%s304] sm:$0x1] %v540
        %s543 = sand.u32 %s160, 1
        %s544 = scalar_lea.sflag [#allocation5], %s543
        %s545 = sand.u32 %s160, 1
        %s546 = scalar_lea.vmem [#allocation6], %s545
        // Predicated region
        $region87: #{tpu_custom_call.1} parent=77 // pred_check
          %p547 = pneg %p170
        $region88: #{tpu_custom_call.1} parent=77 // pred_check_branch
          %549 = sbr.rel (%p547) target = $region90
        $region89: #{tpu_custom_call.1} parent=77 // pred_region
          %551 = vsyncadd %s544, 0
          %s552 = scalar_lea.hbm %s6, %s21
          %s554 = sshll.u32 %s546, 4
          %s555 = int_to_ptr.vmem [resolvable:$true] %s554
          %s556 = sshll.u32 %s552, 4
          %s557 = int_to_ptr.hbm [resolvable:$true] %s556
          %559 = dma.vmem_to_hbm [thread:$0]  %s555, 16, %s557, %s544
        $region90: #{tpu_custom_call.1} parent=77 // pred_fallthru
          _
      $region78: #{tpu_custom_call.1} parent=5 // pred_fallthru
        _
      %p560 = scmp.le.s32.totalorder 2, %s16
      // Predicated region
      $region91: #{tpu_custom_call.1} parent=5 // pred_check
        %p561 = pneg %p560
      $region92: #{tpu_custom_call.1} parent=5 // pred_check_branch
        %563 = sbr.rel (%p561) target = $region94
      $region93: #{tpu_custom_call.1} parent=5 // pred_region
        %s564 = ssub.s32 %s16, 2
        // Predicated region
        $region95: #{tpu_custom_call.1} parent=93 // pred_check
          %p565 = pneg %p176
        $region96: #{tpu_custom_call.1} parent=93 // pred_check_branch
          %567 = sbr.rel (%p565) target = $region98
        $region97: #{tpu_custom_call.1} parent=93 // pred_region
          %s568 = sand.u32 %s161, 1
          %s569 = scalar_lea.sflag [#allocation5], %s568
          %s570 = sand.u32 %s161, 1
          %s571 = scalar_lea.vmem [#allocation6], %s570
          %573 = dma.done %s569, 16
        $region98: #{tpu_custom_call.1} parent=93 // pred_fallthru
          _
      $region94: #{tpu_custom_call.1} parent=5 // pred_fallthru
        _
    $region6: #{tpu_custom_call.1} parent=1 // loop_footer
      %s20 = sadd.s32 1, %s16
    $region7: #{tpu_custom_call.1} parent=1 // loop_footer_branch
      %15 = sbr.rel target = $region3
    $region8: #{tpu_custom_call.1} parent=1 // loop_exit
      _
    %574 = vsyncpa [#allocation4], 1
    %s575 = scalar_lea.sflag [#allocation4], 1
    %576 = vsyncpa %s575, 1
    %577 = vsyncpa [#allocation5], 1
    %s578 = scalar_lea.sflag [#allocation5], 1
    %579 = vsyncpa %s578, 1

// kernel: tpu_custom_call.1
$region0: #{tpu_custom_call.1}
  #allocation0 [shape = 'u32[]', space=smem, size = 0x4, offset = 0x4, fixed_abs, tag = 'smem constant byte address 0x4 - core index']
  #allocation1 [shape = 'u32[72,128]{1,0:T(1,128)}', space=vmem, size = 0x9000, scoped, tag = 'internal scratch']
  %s0 = inlined_call_operand.vmem [shape: f32[16,256], index: 0, kind: input, shape index: {}]
  %s1 = inlined_call_operand.vmem [shape: f32[32,16], index: 1, kind: input, shape index: {}]
  %s2 = inlined_call_operand.vmem [shape: f32[32,32], index: 2, kind: input, shape index: {}]
  %s3 = inlined_call_operand.hbm [shape: f32[32,32], index: 3, kind: input, shape index: {}]
  %s4 = inlined_call_operand.vmem [shape: f32[1,32], index: 4, kind: input, shape index: {}]
  %s5 = inlined_call_operand.vmem [shape: f32[32,4], index: 5, kind: input, shape index: {}]
  %s6 = inlined_call_operand.hbm [shape: f32[1,256], index: 6, kind: output, shape index: {}]
  %s7 = sld [smem:[#allocation0]]
  $region99: #{tpu_custom_call.1} parent=0
    _
  %s9 = ssub.s32 1, %s7
  %s10 = scalar_select 0, %s9, %s7
  $region1: #{tpu_custom_call.1} parent=0
    #allocation2 [shape = 'u8[16384]{0}', space=vmem, size = 0x4000, scoped, tag = 'input window, operand 0']
    #allocation3 [shape = 'u8[16384]{0}', space=vmem, size = 0x4000, scoped, tag = 'input window, operand 3, single buffered']
    #allocation4 [shape = 's32[2]{0}', space=sflag, size = 0x8, scoped, tag = 'scoped memory for tpu_custom_call.1']
    #allocation5 [shape = 's32[2]{0}', space=sflag, size = 0x8, scoped, tag = 'scoped memory for tpu_custom_call.1']
    #allocation6 [shape = 'u8[1024]{0}', space=vmem, size = 0x400, scoped, tag = 'output window, operand 0']
    %11 = vsyncpa [#allocation4], 0
    %12 = vsyncpa [#allocation5], 0
    %s13 = scalar_lea.sflag [#allocation5], 1
    %14 = vsyncpa %s13, 0
    loop: start=0, step=1, limit=4
    $region2: #{tpu_custom_call.1} parent=1 // loop_pre_header
      _
    $region3: #{tpu_custom_call.1} parent=1 // loop_header
      %s16 = sphi 0, %s20
      %p17 = scmp.ge.s32.totalorder %s16, 4
      %s26 = sphi 0, %s28
      %s29 = sphi 0, %s26
      %s30 = sphi 0, %s29
      %s46 = sphi 0, %s30
      %s50 = sphi 0, %s50
      %s52 = sphi 0, %s50
      %s53 = sphi 0, %s52
      %s67 = sphi 0, %s53
      %s71 = sphi 0, %s71
      %s73 = sphi 0, %s71
      %s74 = sphi 0, %s73
      %s88 = sphi 0, %s74
      %s92 = sphi 0, %s92
      %s94 = sphi 0, %s92
      %s95 = sphi 0, %s94
      %s109 = sphi 0, %s95
      %s113 = sphi 0, %s113
      %s115 = sphi 0, %s113
      %s116 = sphi 0, %s115
      %s130 = sphi 0, %s116
      %s134 = sphi 0, %s134
      %s136 = sphi 0, %s134
      %s137 = sphi 0, %s136
      %s151 = sphi 0, %s137
      %s157 = sphi 0, %s159
      %s160 = sphi 0, %s157
      %s161 = sphi 0, %s160
      %s177 = sphi 0, %s161
    $region4: #{tpu_custom_call.1} parent=1 // loop_header_branch
      %19 = sbr.rel (%p17) target = $region8
    $region5: #{tpu_custom_call.1} parent=1 // loop_body
      %s21 = ssub.s32 %s16, 1
      %s22 = ssub.s32 %s16, 2
      %s23 = sadd.s32 %s16, 1
      %s24 = ssub.s32 %s16, %s23
      %p25 = scmp.eq.s32.totalorder %s24, 0
      %s27 = sadd.s32 %s26, 1
      %s28 = scalar_select %p25, %s26, %s27
      %p31 = pneg %p25
      %p32 = scmp.eq.s32.totalorder %s16, 1
      %p33 = por %p31, %p32
      %p34 = scmp.ne.s32.totalorder %s26, %s29
      %p35 = scmp.eq.s32.totalorder %s16, 0
      %p36 = por %p34, %p35
      %p37 = scmp.ne.s32.totalorder %s26, %s29
      %p38 = scmp.eq.s32.totalorder %s21, 1
      %p39 = por %p37, %p38
      %p40 = scmp.ne.s32.totalorder %s29, %s30
      %p41 = scmp.eq.s32.totalorder %s21, 0
      %p42 = por %p40, %p41
      %p43 = scmp.ne.s32.totalorder %s29, %s30
      %p44 = scmp.eq.s32.totalorder %s22, 1
      %p45 = por %p43, %p44
      %p47 = scmp.ne.s32.totalorder %s30, %s46
      %p48 = scmp.eq.s32.totalorder %s22, 0
      %p49 = por %p47, %p48
      %s51 = sadd.s32 %s50, 1
      %p54 = scmp.eq.s32.totalorder %s16, 1
      %p55 = scmp.ne.s32.totalorder %s50, %s52
      %p56 = scmp.eq.s32.totalorder %s16, 0
      %p57 = por %p55, %p56
      %p58 = scmp.ne.s32.totalorder %s50, %s52
      %p59 = scmp.eq.s32.totalorder %s21, 1
      %p60 = por %p58, %p59
      %p61 = scmp.ne.s32.totalorder %s52, %s53
      %p62 = scmp.eq.s32.totalorder %s21, 0
      %p63 = por %p61, %p62
      %p64 = scmp.ne.s32.totalorder %s52, %s53
      %p65 = scmp.eq.s32.totalorder %s22, 1
      %p66 = por %p64, %p65
      %p68 = scmp.ne.s32.totalorder %s53, %s67
      %p69 = scmp.eq.s32.totalorder %s22, 0
      %p70 = por %p68, %p69
      %s72 = sadd.s32 %s71, 1
      %p75 = scmp.eq.s32.totalorder %s16, 1
      %p76 = scmp.ne.s32.totalorder %s71, %s73
      %p77 = scmp.eq.s32.totalorder %s16, 0
      %p78 = por %p76, %p77
      %p79 = scmp.ne.s32.totalorder %s71, %s73
      %p80 = scmp.eq.s32.totalorder %s21, 1
      %p81 = por %p79, %p80
      %p82 = scmp.ne.s32.totalorder %s73, %s74
      %p83 = scmp.eq.s32.totalorder %s21, 0
      %p84 = por %p82, %p83
      %p85 = scmp.ne.s32.totalorder %s73, %s74
      %p86 = scmp.eq.s32.totalorder %s22, 1
      %p87 = por %p85, %p86
      %p89 = scmp.ne.s32.totalorder %s74, %s88
      %p90 = scmp.eq.s32.totalorder %s22, 0
      %p91 = por %p89, %p90
      %s93 = sadd.s32 %s92, 1
      %p96 = scmp.eq.s32.totalorder %s16, 1
      %p97 = scmp.ne.s32.totalorder %s92, %s94
      %p98 = scmp.eq.s32.totalorder %s16, 0
      %p99 = por %p97, %p98
      %p100 = scmp.ne.s32.totalorder %s92, %s94
      %p101 = scmp.eq.s32.totalorder %s21, 1
      %p102 = por %p100, %p101
      %p103 = scmp.ne.s32.totalorder %s94, %s95
      %p104 = scmp.eq.s32.totalorder %s21, 0
      %p105 = por %p103, %p104
      %p106 = scmp.ne.s32.totalorder %s94, %s95
      %p107 = scmp.eq.s32.totalorder %s22, 1
      %p108 = por %p106, %p107
      %p110 = scmp.ne.s32.totalorder %s95, %s109
      %p111 = scmp.eq.s32.totalorder %s22, 0
      %p112 = por %p110, %p111
      %s114 = sadd.s32 %s113, 1
      %p117 = scmp.eq.s32.totalorder %s16, 1
      %p118 = scmp.ne.s32.totalorder %s113, %s115
      %p119 = scmp.eq.s32.totalorder %s16, 0
      %p120 = por %p118, %p119
      %p121 = scmp.ne.s32.totalorder %s113, %s115
      %p122 = scmp.eq.s32.totalorder %s21, 1
      %p123 = por %p121, %p122
      %p124 = scmp.ne.s32.totalorder %s115, %s116
      %p125 = scmp.eq.s32.totalorder %s21, 0
      %p126 = por %p124, %p125
      %p127 = scmp.ne.s32.totalorder %s115, %s116
      %p128 = scmp.eq.s32.totalorder %s22, 1
      %p129 = por %p127, %p128
      %p131 = scmp.ne.s32.totalorder %s116, %s130
      %p132 = scmp.eq.s32.totalorder %s22, 0
      %p133 = por %p131, %p132
      %s135 = sadd.s32 %s134, 1
      %p138 = scmp.eq.s32.totalorder %s16, 1
      %p139 = scmp.ne.s32.totalorder %s134, %s136
      %p140 = scmp.eq.s32.totalorder %s16, 0
      %p141 = por %p139, %p140
      %p142 = scmp.ne.s32.totalorder %s134, %s136
      %p143 = scmp.eq.s32.totalorder %s21, 1
      %p144 = por %p142, %p143
      %p145 = scmp.ne.s32.totalorder %s136, %s137
      %p146 = scmp.eq.s32.totalorder %s21, 0
      %p147 = por %p145, %p146
      %p148 = scmp.ne.s32.totalorder %s136, %s137
      %p149 = scmp.eq.s32.totalorder %s22, 1
      %p150 = por %p148, %p149
      %p152 = scmp.ne.s32.totalorder %s137, %s151
      %p153 = scmp.eq.s32.totalorder %s22, 0
      %p154 = por %p152, %p153
      %s155 = ssub.s32 %s16, %s23
      %p156 = scmp.eq.s32.totalorder %s155, 0
      %s158 = sadd.s32 %s157, 1
      %s159 = scalar_select %p156, %s157, %s158
      %p162 = pneg %p156
      %p163 = scmp.eq.s32.totalorder %s16, 1
      %p164 = por %p162, %p163
      %p165 = scmp.ne.s32.totalorder %s157, %s160
      %p166 = scmp.eq.s32.totalorder %s16, 0
      %p167 = por %p165, %p166
      %p168 = scmp.ne.s32.totalorder %s157, %s160
      %p169 = scmp.eq.s32.totalorder %s21, 1
      %p170 = por %p168, %p169
      %p171 = scmp.ne.s32.totalorder %s160, %s161
      %p172 = scmp.eq.s32.totalorder %s21, 0
      %p173 = por %p171, %p172
      %p174 = scmp.ne.s32.totalorder %s160, %s161
      %p175 = scmp.eq.s32.totalorder %s22, 1
      %p176 = por %p174, %p175
      %p178 = scmp.ne.s32.totalorder %s161, %s177
      %p179 = scmp.eq.s32.totalorder %s22, 0
      %p180 = por %p178, %p179
      %p181 = scmp.le.s32.totalorder 1, %s16
      %p182 = scmp.lt.s32.totalorder %s16, 3
      %p183 = pnand %p181, %p182
      %p184 = pneg %p183
      // Predicated region
      $region9: #{tpu_custom_call.1} parent=5 // pred_check
        _
      $region10: #{tpu_custom_call.1} parent=5 // pred_check_branch
        %186 = sbr.rel (%p183) target = $region12
      $region11: #{tpu_custom_call.1} parent=5 // pred_region
        %s187 = ssub.s32 %s16, 1
        // Predicated region
        $region13: #{tpu_custom_call.1} parent=11 // pred_check
          %p188 = pneg %p63
        $region14: #{tpu_custom_call.1} parent=11 // pred_check_branch
          %190 = sbr.rel (%p188) target = $region16
        $region15: #{tpu_custom_call.1} parent=11 // pred_region
          _
        $region16: #{tpu_custom_call.1} parent=11 // pred_fallthru
          _
        // Predicated region
        $region17: #{tpu_custom_call.1} parent=11 // pred_check
          %p191 = pneg %p84
        $region18: #{tpu_custom_call.1} parent=11 // pred_check_branch
          %193 = sbr.rel (%p191) target = $region20
        $region19: #{tpu_custom_call.1} parent=11 // pred_region
          _
        $region20: #{tpu_custom_call.1} parent=11 // pred_fallthru
          _
        // Predicated region
        $region21: #{tpu_custom_call.1} parent=11 // pred_check
          %p194 = pneg %p105
        $region22: #{tpu_custom_call.1} parent=11 // pred_check_branch
          %196 = sbr.rel (%p194) target = $region24
        $region23: #{tpu_custom_call.1} parent=11 // pred_region
          %198 = vsyncadd [#allocation4], 0
          %s199 = sshll.u32 %s3, 4
          %s200 = int_to_ptr.hbm [resolvable:$true] %s199
          %s201 = sshll.u32 [#allocation3], 4
          %s202 = int_to_ptr.vmem [resolvable:$true] %s201
          %207 = dma.hbm_to_vmem [thread:$0]  %s200, 512, %s202, [#allocation4], 128, 128, 8
        $region24: #{tpu_custom_call.1} parent=11 // pred_fallthru
          _
        // Predicated region
        $region25: #{tpu_custom_call.1} parent=11 // pred_check
          %p208 = pneg %p126
        $region26: #{tpu_custom_call.1} parent=11 // pred_check_branch
          %210 = sbr.rel (%p208) target = $region28
        $region27: #{tpu_custom_call.1} parent=11 // pred_region
          _
        $region28: #{tpu_custom_call.1} parent=11 // pred_fallthru
          _
        // Predicated region
        $region29: #{tpu_custom_call.1} parent=11 // pred_check
          %p211 = pneg %p147
        $region30: #{tpu_custom_call.1} parent=11 // pred_check_branch
          %213 = sbr.rel (%p211) target = $region32
        $region31: #{tpu_custom_call.1} parent=11 // pred_region
          _
        $region32: #{tpu_custom_call.1} parent=11 // pred_fallthru
          _
      $region12: #{tpu_custom_call.1} parent=5 // pred_fallthru
        _
      %p214 = scmp.lt.s32.totalorder %s16, 2
      // Predicated region
      $region33: #{tpu_custom_call.1} parent=5 // pred_check
        %p215 = pneg %p214
      $region34: #{tpu_custom_call.1} parent=5 // pred_check_branch
        %217 = sbr.rel (%p215) target = $region36
      $region35: #{tpu_custom_call.1} parent=5 // pred_region
        // Predicated region
        $region37: #{tpu_custom_call.1} parent=35 // pred_check
          %p218 = pneg %p36
        $region38: #{tpu_custom_call.1} parent=35 // pred_check_branch
          %220 = sbr.rel (%p218) target = $region40
        $region39: #{tpu_custom_call.1} parent=35 // pred_region
          %s221 = sand.u32 %s26, 1
          %s222 = sand.u32 %s26, 1
          %s223 = smul.addr %s222, 16
          %s224 = scalar_lea.vmem [#allocation2], %s223
          %s225 = smul.addr %s16, 8
          %s226 = scalar_lea.vmem %s0, %s225
          // Predicated region
          $region41: #{tpu_custom_call.1} parent=39 // pred_check
            _
          $region42: #{tpu_custom_call.1} parent=39 // pred_check_branch
            %228 = sbr.rel (0) target = $region44
          $region43: #{tpu_custom_call.1} parent=39 // pred_region
            // Predicated region
            $region45: #{tpu_custom_call.1} parent=43 // pred_check
              _
            $region46: #{tpu_custom_call.1} parent=43 // pred_check_branch
              %230 = sbr.rel (0) target = $region48
            $region47: #{tpu_custom_call.1} parent=43 // pred_region
              // Predicated region
              $region60: #{tpu_custom_call.1} parent=47 // pred_check
                _
              $region61: #{tpu_custom_call.1} parent=47 // pred_check_branch
                %248 = sbr.rel (0) target = $region63
              $region62: #{tpu_custom_call.1} parent=47 // pred_region
                loop: start=0, step=1, limit=1
                $region64: #{tpu_custom_call.1} parent=62 // loop_pre_header
                  _
                $region65: #{tpu_custom_call.1} parent=62 // loop_header
                  %s250 = sphi 0, %s254
                  %p251 = scmp.ge.s32.totalorder %s250, 1
                  %s255 = sphi %s226, %s226
                  %s256 = sphi %s224, %s224
                $region66: #{tpu_custom_call.1} parent=62 // loop_header_branch
                  %253 = sbr.rel (%p251) target = $region70
                $region67: #{tpu_custom_call.1} parent=62 // loop_body
                  %v257 = vld [vmem:[%s255] sm:$0xff]
                  %258 = vst [vmem:[%s256] sm:$0xff] %v257
                  %v259 = vld [vmem:[%s255 + $0x10] sm:$0xff]
                  %260 = vst [vmem:[%s256 + $0x8] sm:$0xff] %v259
                $region68: #{tpu_custom_call.1} parent=62 // loop_footer
                  %s254 = sadd.s32 1, %s250
                $region69: #{tpu_custom_call.1} parent=62 // loop_footer_branch
                  %249 = sbr.rel target = $region65
                $region70: #{tpu_custom_call.1} parent=62 // loop_exit
                  _
              $region63: #{tpu_custom_call.1} parent=47 // pred_fallthru
                _
              // Predicated region
              $region71: #{tpu_custom_call.1} parent=47 // pred_check
                _
              $region72: #{tpu_custom_call.1} parent=47 // pred_check_branch
                %262 = sbr.rel target = $region74
              $region73: #{tpu_custom_call.1} parent=47 // pred_region
                _
              $region74: #{tpu_custom_call.1} parent=47 // pred_fallthru
                _
            $region48: #{tpu_custom_call.1} parent=43 // pred_fallthru
              _
            // Predicated region
            $region49: #{tpu_custom_call.1} parent=43 // pred_check
              _
            $region50: #{tpu_custom_call.1} parent=43 // pred_check_branch
              %232 = sbr.rel target = $region52
            $region51: #{tpu_custom_call.1} parent=43 // pred_region
              %s234 = ssub.s32 256, 1
              loop: start=0, step=1, limit=1
              $region53: #{tpu_custom_call.1} parent=51 // loop_pre_header
                _
              $region54: #{tpu_custom_call.1} parent=51 // loop_header
                %s236 = sphi 0, %s240
                %p237 = scmp.ge.s32.totalorder %s236, 1
                %s241 = sphi %s226, %s226
                %s242 = sphi %s224, %s224
              $region55: #{tpu_custom_call.1} parent=51 // loop_header_branch
                %239 = sbr.rel (%p237) target = $region59
              $region56: #{tpu_custom_call.1} parent=51 // loop_body
                %v243 = vld [vmem:[%s241] sm:%s234]
                %244 = vst [vmem:[%s242] sm:%s234] %v243
                %v245 = vld [vmem:[%s241 + $0x10] sm:%s234]
                %246 = vst [vmem:[%s242 + $0x8] sm:%s234] %v245
              $region57: #{tpu_custom_call.1} parent=51 // loop_footer
                %s240 = sadd.s32 1, %s236
              $region58: #{tpu_custom_call.1} parent=51 // loop_footer_branch
                %235 = sbr.rel target = $region54
              $region59: #{tpu_custom_call.1} parent=51 // loop_exit
                _
            $region52: #{tpu_custom_call.1} parent=43 // pred_fallthru
              _
          $region44: #{tpu_custom_call.1} parent=39 // pred_fallthru
            _
          %263 = vnop
        $region40: #{tpu_custom_call.1} parent=35 // pred_fallthru
          _
      $region36: #{tpu_custom_call.1} parent=5 // pred_fallthru
        _
      %p264 = scmp.le.s32.totalorder 1, %s16
      %p265 = scmp.lt.s32.totalorder %s16, 3
      %p266 = pnand %p264, %p265
      %p267 = pneg %p266
      // Predicated region
      $region75: #{tpu_custom_call.1} parent=5 // pred_check
        _
      $region76: #{tpu_custom_call.1} parent=5 // pred_check_branch
        %269 = sbr.rel (%p266) target = $region78
      $region77: #{tpu_custom_call.1} parent=5 // pred_region
        %s270 = ssub.s32 %s16, 1
        %s271 = sand.u32 %s29, 1
        %s272 = sand.u32 %s29, 1
        %s273 = smul.addr %s272, 16
        %s274 = scalar_lea.vmem [#allocation2], %s273
        // Predicated region
        $region79: #{tpu_custom_call.1} parent=77 // pred_check
          %p275 = pneg %p42
        $region80: #{tpu_custom_call.1} parent=77 // pred_check_branch
          %277 = sbr.rel (%p275) target = $region82
        $region81: #{tpu_custom_call.1} parent=77 // pred_region
          _
        $region82: #{tpu_custom_call.1} parent=77 // pred_fallthru
          _
        // Predicated region
        $region83: #{tpu_custom_call.1} parent=77 // pred_check
          %p278 = pneg %p105
        $region84: #{tpu_custom_call.1} parent=77 // pred_check_branch
          %280 = sbr.rel (%p278) target = $region86
        $region85: #{tpu_custom_call.1} parent=77 // pred_region
          %282 = dma.done [#allocation4], 512
        $region86: #{tpu_custom_call.1} parent=77 // pred_fallthru
          _
        %s283 = sand.u32 %s29, 1
        %s284 = sand.u32 %s29, 1
        %s285 = smul.addr %s284, 16
        %s286 = scalar_lea.vmem [#allocation2], %s285
        %p287 = pneg %p42
        %p288 = pneg %p39
        %p289 = pneg %p63
        %p290 = pneg %p60
        %p291 = pneg %p84
        %p292 = pneg %p81
        %p293 = pneg %p105
        %p294 = pneg %p102
        %p295 = pneg %p126
        %p296 = pneg %p123
        %p297 = pneg %p147
        %p298 = pneg %p144
        %p299 = pneg %p173
        %p300 = pneg %p170
        %s301 = sand.u32 %s160, 1
        %s302 = scalar_lea.sflag [#allocation5], %s301
        %s303 = sand.u32 %s160, 1
        %s304 = scalar_lea.vmem [#allocation6], %s303
        %v305 = vld [vmem:[%s1] sm:$0xff]
        %v306 = vld [vmem:[%s1 + $0x8] sm:$0xff]
        %v307 = vld [vmem:[%s1 + $0x10] sm:$0xff]
        %v308 = vld [vmem:[%s1 + $0x18] sm:$0xff]
        %v309 = vld [vmem:[%s274] sm:$0xff]
        %v310 = vld [vmem:[%s274 + $0x8] sm:$0xff]
        %v311 = vld [vmem:[%s5] sm:$0xff]
        %v312 = vld [vmem:[%s5 + $0x8] sm:$0xff]
        %v313 = vld [vmem:[%s5 + $0x10] sm:$0xff]
        %v314 = vld [vmem:[%s5 + $0x18] sm:$0xff]
        %316 = vset.pattern.permute.xlu0 0
        %317 = vperm.xlu0 %316, %v311
        %v318 = vpop.permute.xlu0 %317
        %321 = vset.pattern.permute.xlu0 0
        %322 = vperm.xlu0 %321, %v312
        %v323 = vpop.permute.xlu0 %322
        %326 = vset.pattern.permute.xlu0 0
        %327 = vperm.xlu0 %326, %v313
        %v328 = vpop.permute.xlu0 %327
        %331 = vset.pattern.permute.xlu0 0
        %332 = vperm.xlu0 %331, %v314
        %v333 = vpop.permute.xlu0 %332
        %vm335 = vcmask 130048
        %v337 = vsel %vm335, %v305, 0
        %v340 = vsel %vm335, %v306, 0
        %v343 = vsel %vm335, %v307, 0
        %v346 = vsel %vm335, %v308, 0
        %348 = vmatpush.msra.mxu0 0.0
        %349 = vmatpush.msra.mxu0 0.0
        %350 = vmatpush.msra.mxu0 0.0
        %351 = vmatpush.msra.mxu0 0.0
        %352 = vmatpush.msra.mxu0 0.0
        %353 = vmatpush.msra.mxu0 0.0
        %354 = vmatpush.msra.mxu0 0.0
        %355 = vmatpush.msra.mxu0 0.0
        %356 = vmatpush.msra.mxu0 0.0
        %357 = vmatpush.msra.mxu0 0.0
        %358 = vmatpush.msra.mxu0 0.0
        %359 = vmatpush.msra.mxu0 0.0
        %360 = vmatpush.msra.mxu0 0.0
        %361 = vmatpush.msra.mxu0 0.0
        %362 = vmatpush.msra.mxu0 %v310
        %363 = vmatpush.msra.mxu0 %v309
        %364 = vmatmul.f32.gmra.mxu0 %v337
        %v365 = vpop.f32.mrf.mxu0
        %v366 = vadd.f32 %v318, %v365
        %367 = vmatmul.f32.gmra.mxu0 %v340
        %v368 = vpop.f32.mrf.mxu0
        %v369 = vadd.f32 %v323, %v368
        %370 = vmatmul.f32.gmra.mxu0 %v343
        %v371 = vpop.f32.mrf.mxu0
        %v372 = vadd.f32 %v328, %v371
        %373 = vmatmul.f32.gmra.mxu0 %v346
        %v374 = vpop.f32.mrf.mxu0
        %v375 = vadd.f32 %v333, %v374
        %376 = vdwg.mxu0
        %v377 = vmax.f32 %v366, 0.0
        %v378 = vmax.f32 %v369, 0.0
        %v379 = vmax.f32 %v372, 0.0
        %v380 = vmax.f32 %v375, 0.0
        %v381 = vld [vmem:[%s2] sm:$0xff]
        %v382 = vld [vmem:[%s2 + $0x8] sm:$0xff]
        %v383 = vld [vmem:[%s2 + $0x10] sm:$0xff]
        %v384 = vld [vmem:[%s2 + $0x18] sm:$0xff]
        %385 = vset.pattern.permute.xlu0 1
        %386 = vperm.xlu0 %385, %v311
        %v387 = vpop.permute.xlu0 %386
        %389 = vset.pattern.permute.xlu0 1
        %390 = vperm.xlu0 %389, %v312
        %v391 = vpop.permute.xlu0 %390
        %393 = vset.pattern.permute.xlu0 1
        %394 = vperm.xlu0 %393, %v313
        %v395 = vpop.permute.xlu0 %394
        %397 = vset.pattern.permute.xlu0 1
        %398 = vperm.xlu0 %397, %v314
        %v399 = vpop.permute.xlu0 %398
        %vm401 = vcmask 261120
        %v403 = vsel %vm401, %v381, 0
        %v406 = vsel %vm401, %v382, 0
        %v409 = vsel %vm401, %v383, 0
        %v412 = vsel %vm401, %v384, 0
        %414 = vmatpush.msra.mxu0 0.0
        %415 = vmatpush.msra.mxu0 0.0
        %416 = vmatpush.msra.mxu0 0.0
        %417 = vmatpush.msra.mxu0 0.0
        %418 = vmatpush.msra.mxu0 0.0
        %419 = vmatpush.msra.mxu0 0.0
        %420 = vmatpush.msra.mxu0 0.0
        %421 = vmatpush.msra.mxu0 0.0
        %422 = vmatpush.msra.mxu0 0.0
        %423 = vmatpush.msra.mxu0 0.0
        %424 = vmatpush.msra.mxu0 0.0
        %425 = vmatpush.msra.mxu0 0.0
        %426 = vmatpush.msra.mxu0 %v380
        %427 = vmatpush.msra.mxu0 %v379
        %428 = vmatpush.msra.mxu0 %v378
        %429 = vmatpush.msra.mxu0 %v377
        %430 = vmatmul.f32.gmra.mxu0 %v403
        %v431 = vpop.f32.mrf.mxu0
        %v432 = vadd.f32 %v387, %v431
        %433 = vmatmul.f32.gmra.mxu0 %v406
        %v434 = vpop.f32.mrf.mxu0
        %v435 = vadd.f32 %v391, %v434
        %436 = vmatmul.f32.gmra.mxu0 %v409
        %v437 = vpop.f32.mrf.mxu0
        %v438 = vadd.f32 %v395, %v437
        %439 = vmatmul.f32.gmra.mxu0 %v412
        %v440 = vpop.f32.mrf.mxu0
        %v441 = vadd.f32 %v399, %v440
        %442 = vdwg.mxu0
        %v443 = vmax.f32 %v432, 0.0
        %v444 = vmax.f32 %v435, 0.0
        %v445 = vmax.f32 %v438, 0.0
        %v446 = vmax.f32 %v441, 0.0
        %v447 = vld [vmem:[#allocation3] sm:$0xff]
        %v448 = vld [vmem:[#allocation3 + $0x8] sm:$0xff]
        %v449 = vld [vmem:[#allocation3 + $0x10] sm:$0xff]
        %v450 = vld [vmem:[#allocation3 + $0x18] sm:$0xff]
        %451 = vset.pattern.permute.xlu0 2
        %452 = vperm.xlu0 %451, %v311
        %v453 = vpop.permute.xlu0 %452
        %455 = vset.pattern.permute.xlu0 2
        %456 = vperm.xlu0 %455, %v312
        %v457 = vpop.permute.xlu0 %456
        %459 = vset.pattern.permute.xlu0 2
        %460 = vperm.xlu0 %459, %v313
        %v461 = vpop.permute.xlu0 %460
        %463 = vset.pattern.permute.xlu0 2
        %464 = vperm.xlu0 %463, %v314
        %v465 = vpop.permute.xlu0 %464
        %v468 = vsel %vm401, %v447, 0
        %v471 = vsel %vm401, %v448, 0
        %v474 = vsel %vm401, %v449, 0
        %v477 = vsel %vm401, %v450, 0
        %479 = vmatpush.msra.mxu0 0.0
        %480 = vmatpush.msra.mxu0 0.0
        %481 = vmatpush.msra.mxu0 0.0
        %482 = vmatpush.msra.mxu0 0.0
        %483 = vmatpush.msra.mxu0 0.0
        %484 = vmatpush.msra.mxu0 0.0
        %485 = vmatpush.msra.mxu0 0.0
        %486 = vmatpush.msra.mxu0 0.0
        %487 = vmatpush.msra.mxu0 0.0
        %488 = vmatpush.msra.mxu0 0.0
        %489 = vmatpush.msra.mxu0 0.0
        %490 = vmatpush.msra.mxu0 0.0
        %491 = vmatpush.msra.mxu0 %v446
        %492 = vmatpush.msra.mxu0 %v445
        %493 = vmatpush.msra.mxu0 %v444
        %494 = vmatpush.msra.mxu0 %v443
        %495 = vmatmul.f32.gmra.mxu0 %v468
        %v496 = vpop.f32.mrf.mxu0
        %v497 = vadd.f32 %v453, %v496
        %498 = vmatmul.f32.gmra.mxu0 %v471
        %v499 = vpop.f32.mrf.mxu0
        %v500 = vadd.f32 %v457, %v499
        %501 = vmatmul.f32.gmra.mxu0 %v474
        %v502 = vpop.f32.mrf.mxu0
        %v503 = vadd.f32 %v461, %v502
        %504 = vmatmul.f32.gmra.mxu0 %v477
        %v505 = vpop.f32.mrf.mxu0
        %v506 = vadd.f32 %v465, %v505
        %507 = vdwg.mxu0
        %v508 = vmax.f32 %v497, 0.0
        %v509 = vmax.f32 %v500, 0.0
        %v510 = vmax.f32 %v503, 0.0
        %v511 = vmax.f32 %v506, 0.0
        %v512 = vld [vmem:[%s4] sm:$0x1]
        %v513 = vld [vmem:[%s5] sm:$0x1]
        %515 = vset.pattern.permute.xlu0 3
        %516 = vperm.xlu0 %515, %v513
        %v517 = vpop.permute.xlu0 %516
        %v520 = vsel %vm401, %v512, 0
        %522 = vmatpush.msra.mxu0 0.0
        %523 = vmatpush.msra.mxu0 0.0
        %524 = vmatpush.msra.mxu0 0.0
        %525 = vmatpush.msra.mxu0 0.0
        %526 = vmatpush.msra.mxu0 0.0
        %527 = vmatpush.msra.mxu0 0.0
        %528 = vmatpush.msra.mxu0 0.0
        %529 = vmatpush.msra.mxu0 0.0
        %530 = vmatpush.msra.mxu0 0.0
        %531 = vmatpush.msra.mxu0 0.0
        %532 = vmatpush.msra.mxu0 0.0
        %533 = vmatpush.msra.mxu0 0.0
        %534 = vmatpush.msra.mxu0 %v511
        %535 = vmatpush.msra.mxu0 %v510
        %536 = vmatpush.msra.mxu0 %v509
        %537 = vmatpush.msra.mxu0 %v508
        %538 = vmatmul.f32.gmra.mxu0 %v520
        %v539 = vpop.f32.mrf.mxu0
        %v540 = vadd.f32 %v517, %v539
        %541 = vdwg.mxu0
        %542 = vst [vmem:[%s304] sm:$0x1] %v540
        %s543 = sand.u32 %s160, 1
        %s544 = scalar_lea.sflag [#allocation5], %s543
        %s545 = sand.u32 %s160, 1
        %s546 = scalar_lea.vmem [#allocation6], %s545
        // Predicated region
        $region87: #{tpu_custom_call.1} parent=77 // pred_check
          %p547 = pneg %p170
        $region88: #{tpu_custom_call.1} parent=77 // pred_check_branch
          %549 = sbr.rel (%p547) target = $region90
        $region89: #{tpu_custom_call.1} parent=77 // pred_region
          %551 = vsyncadd %s544, 0
          %s552 = scalar_lea.hbm %s6, %s21
          %s554 = sshll.u32 %s546, 4
          %s555 = int_to_ptr.vmem [resolvable:$true] %s554
          %s556 = sshll.u32 %s552, 4
          %s557 = int_to_ptr.hbm [resolvable:$true] %s556
          %559 = dma.vmem_to_hbm [thread:$0]  %s555, 16, %s557, %s544
        $region90: #{tpu_custom_call.1} parent=77 // pred_fallthru
          _
      $region78: #{tpu_custom_call.1} parent=5 // pred_fallthru
        _
      %p560 = scmp.le.s32.totalorder 2, %s16
      // Predicated region
      $region91: #{tpu_custom_call.1} parent=5 // pred_check
        %p561 = pneg %p560
      $region92: #{tpu_custom_call.1} parent=5 // pred_check_branch
        %563 = sbr.rel (%p561) target = $region94
      $region93: #{tpu_custom_call.1} parent=5 // pred_region
        %s564 = ssub.s32 %s16, 2
        // Predicated region
        $region95: #{tpu_custom_call.1} parent=93 // pred_check
          %p565 = pneg %p176
        $region96: #{tpu_custom_call.1} parent=93 // pred_check_branch
          %567 = sbr.rel (%p565) target = $region98
        $region97: #{tpu_custom_call.1} parent=93 // pred_region
          %s568 = sand.u32 %s161, 1
          %s569 = scalar_lea.sflag [#allocation5], %s568
          %s570 = sand.u32 %s161, 1
          %s571 = scalar_lea.vmem [#allocation6], %s570
          %573 = dma.done %s569, 16
        $region98: #{tpu_custom_call.1} parent=93 // pred_fallthru
          _
      $region94: #{tpu_custom_call.1} parent=5 // pred_fallthru
        _
    $region6: #{tpu_custom_call.1} parent=1 // loop_footer
      %s20 = sadd.s32 1, %s16
    $region7: #{tpu_custom_call.1} parent=1 // loop_footer_branch
      %15 = sbr.rel target = $region3
    $region8: #{tpu_custom_call.1} parent=1 // loop_exit
      _
    %574 = vsyncpa [#allocation4], 1
    %s575 = scalar_lea.sflag [#allocation4], 1
    %576 = vsyncpa %s575, 1
    %577 = vsyncpa [#allocation5], 1
    %s578 = scalar_lea.sflag [#allocation5], 1
    %579 = vsyncpa %s578, 1

</llo_original>
